<compile_context>
chip_gen: v7x
topology: tpu7x:2x2x1
jax: 0.10.0
libtpu: 0.0.40
codegen_flags: <defaults>
</compile_context>

<pallas_src>
import math

import jax
import jax.numpy as jnp
from jax.experimental import pallas as pl
from jax.experimental.pallas import tpu as pltpu


def _round_up(x, m):
    return (x + m - 1) // m * m


def _cdiv(a, b):
    return (a + b - 1) // b


def _col_tiles(input_size, hidden_size):
    """Padded / tile sizes for the hidden (N) axis and concatenated K axis."""
    hp = _round_up(hidden_size, 128)

    # Hidden tile: prefer >= 2 j-tiles (partitions the weight columns so both
    # v7x TensorCores each stream half of W; near-free on v5e/v6e), each a
    # multiple of 128 lanes, capped at 512 so acc / weight tiles stay small.
    th = hp
    for cand in (512, 256, 128):
        if hp % cand == 0 and hp // cand >= 2:
            th = cand
            break

    # K (reduction) tile: few, large weight DMAs (<= ~4 MiB bf16 tile, <= 2048
    # rows), rounded to a multiple of 128 for clean bf16 packing / MXU K passes.
    k = input_size + hidden_size
    kp128 = _round_up(k, 128)
    tk_cap = min(2048, max(128, ((4 * 1024 * 1024) // (4 * th * 2)) // 128 * 128))
    if kp128 <= tk_cap:
        tk = kp128
        kp = kp128
    else:
        nk = _cdiv(kp128, tk_cap)
        tk = _round_up(_cdiv(kp128, nk), 128)
        kp = nk * tk
    return kp, tk, hp, th


def _row_tiles(batch):
    bp = _round_up(batch, 8)
    if bp <= 512:
        tb = bp          # whole (padded) batch in one tile -> W streamed once
    else:
        tb = 512
        bp = _round_up(batch, tb)
    return bp, tb


def prepare_lstm_params(w, b, input_size, hidden_size,
                        compute_dtype=jnp.bfloat16):
    """One-time weight repack (call outside the hot path and reuse).

    Args:
      w: (4*hidden, input+hidden)  torch.nn.Linear weight layout, gates [i,f,g,o]
      b: (4*hidden,)               torch.nn.Linear bias
    Returns:
      w_p: (Kp, 4*Hp) compute_dtype, gate-interleaved per hidden tile
      b_p: (1, 4*Hp)  float32, same column ordering
    """
    kp, _, hp, th = _col_tiles(input_size, hidden_size)
    k = input_size + hidden_size
    fh = 4 * hidden_size
    assert w.shape == (fh, k) and b.shape == (fh,)
    nj = hp // th

    # (4H, K) -> (K, 4, H), zero-pad K and H, then interleave gates per hidden
    # tile so an N-block of width 4*th holds [i_j | f_j | g_j | o_j].
    w_t = jnp.transpose(w).reshape(k, 4, hidden_size)
    w_t = jnp.pad(w_t, ((0, kp - k), (0, 0), (0, hp - hidden_size)))
    w_p = (w_t.reshape(kp, 4, nj, th)
               .transpose(0, 2, 1, 3)
               .reshape(kp, 4 * hp)
               .astype(compute_dtype))

    b_t = jnp.pad(b.reshape(4, hidden_size), ((0, 0), (0, hp - hidden_size)))
    b_p = (b_t.reshape(4, nj, th)
              .transpose(1, 0, 2)
              .reshape(1, 4 * hp)
              .astype(jnp.float32))
    return w_p, b_p


def _sigmoid(x):
    # exp -> EUP, approx reciprocal -> EUP; keeps the VALU slots free.
    return pl.reciprocal(1.0 + jnp.exp(-x), approx=True)


def _lstm_cell_kernel(xh_ref, w_ref, b_ref, c_ref,
                      c_out_ref, h_out_ref, acc_ref):
    th = c_out_ref.shape[-1]
    k = pl.program_id(2)

    @pl.when(k == 0)
    def _init():
        # Fold the bias into the accumulator init (runs once per output tile).
        acc_ref[...] = jnp.broadcast_to(b_ref[...], acc_ref.shape)

    # bf16 x bf16 -> f32 on the MXU, accumulated in f32.
    acc_ref[...] += jnp.dot(xh_ref[...], w_ref[...],
                            preferred_element_type=jnp.float32)

    @pl.when(k == pl.num_programs(2) - 1)
    def _finalize():
        # Gate-by-gate straight from the accumulator ref: static ref slices are
        # free views, so at most a few (tb, th) f32 tiles are live at once and
        # the (tb, 4*th) accumulator is never materialized as one value
        # (avoids vreg spills in the epilogue).
        f = _sigmoid(acc_ref[:, 1 * th:2 * th])
        c_new = f * c_ref[...].astype(jnp.float32)
        i = _sigmoid(acc_ref[:, 0 * th:1 * th])
        g = jnp.tanh(acc_ref[:, 2 * th:3 * th])
        c_new = c_new + i * g
        c_out_ref[...] = c_new.astype(c_out_ref.dtype)
        o = _sigmoid(acc_ref[:, 3 * th:4 * th])
        h_out_ref[...] = (o * jnp.tanh(c_new)).astype(h_out_ref.dtype)


def _weight_spec(tk, th, nk):
    """Weight BlockSpec; triple-buffered when the K reduction has >1 step."""
    idx = lambda bi, j, kk: (kk, j)
    shape = (tk, 4 * th)
    if nk >= 2:
        try:
            # The per-step matmul is cheap at small batch, so the 1-4 MiB
            # weight DMA is the exposed latency; a third buffer hides jitter.
            return pl.BlockSpec(shape, idx, pipeline_mode=pl.Buffered(3))
        except (TypeError, AttributeError):
            pass  # older JAX without pipeline_mode / Buffered
    return pl.BlockSpec(shape, idx)


@jax.jit
def lstm_cell(x, h, c, w_p, b_p):
    """Single LSTM time step.  Returns (c_prime, h_prime) like the module."""
    batch, input_size = x.shape
    hidden_size = c.shape[-1]
    kp, tk, hp, th = _col_tiles(input_size, hidden_size)
    bp, tb = _row_tiles(batch)
    k = input_size + hidden_size

    # Tiny per-step glue: concat + pad + bf16 cast of *activations* only.
    xh = jnp.concatenate([x, h], axis=-1)
    xh = jnp.pad(xh, ((0, bp - batch), (0, kp - k))).astype(w_p.dtype)
    c_pad = jnp.pad(c, ((0, bp - batch), (0, hp - hidden_size)))

    grid = (bp // tb, hp // th, kp // tk)
    out_dtype = x.dtype

    c_pp, h_pp = pl.pallas_call(
        _lstm_cell_kernel,
        out_shape=(jax.ShapeDtypeStruct((bp, hp), out_dtype),
                   jax.ShapeDtypeStruct((bp, hp), out_dtype)),
        grid_spec=pltpu.PrefetchScalarGridSpec(
            num_scalar_prefetch=0,
            grid=grid,
            in_specs=[
                pl.BlockSpec((tb, tk), lambda bi, j, kk: (bi, kk)),     # [x|h]
                _weight_spec(tk, th, grid[2]),                          # W
                pl.BlockSpec((1, 4 * th), lambda bi, j, kk: (0, j)),    # bias
                pl.BlockSpec((tb, th), lambda bi, j, kk: (bi, j)),      # c_prev
            ],
            out_specs=[
                pl.BlockSpec((tb, th), lambda bi, j, kk: (bi, j)),      # c'
                pl.BlockSpec((tb, th), lambda bi, j, kk: (bi, j)),      # h'
            ],
            scratch_shapes=[pltpu.VMEM((tb, 4 * th), jnp.float32)],
        ),
        compiler_params=pltpu.CompilerParams(
            dimension_semantics=("parallel", "parallel", "arbitrary"),
            vmem_limit_bytes=48 * 1024 * 1024,   # fits v5e/v6e and v7x (64 MiB)
        ),
    )(xh, w_p, b_p, c_pad)

    return c_pp[:batch, :hidden_size], h_pp[:batch, :hidden_size]


def _init_linear_params(key, in_features, out_features, dtype=jnp.float32):
    """Matches torch.nn.Linear default init U(-k, k), k = 1/sqrt(fan_in)."""
    k = 1.0 / math.sqrt(in_features)
    kw, kb = jax.random.split(key)
    w = jax.random.uniform(kw, (out_features, in_features), dtype, -k, k)
    b = jax.random.uniform(kb, (out_features,), dtype, -k, k)
    return w, b


def _reference_lstm_cell(x, h, c, w, b):
    """Pure-JAX f32 reference mirroring the PyTorch forward."""
    hidden = c.shape[-1]
    store = jnp.concatenate([x, h], axis=-1) @ w.T + b
    i = jax.nn.sigmoid(store[:, :hidden])
    f = jax.nn.sigmoid(store[:, hidden:2 * hidden])
    g = jnp.tanh(store[:, 2 * hidden:3 * hidden])
    o = jax.nn.sigmoid(store[:, 3 * hidden:])
    c_prime = f * c + i * g
    h_prime = o * jnp.tanh(c_prime)
    return c_prime, h_prime


if __name__ == "__main__":
    batch = 8
    input_size = 16
    hidden_size = 32

    key = jax.random.PRNGKey(0)
    kx, kh, kc, kp = jax.random.split(key, 4)

    x = jax.random.normal(kx, (batch, input_size), jnp.float32)
    h = jax.random.normal(kh, (batch, hidden_size), jnp.float32)
    c = jax.random.normal(kc, (batch, hidden_size), jnp.float32)
    w, b = _init_linear_params(kp, input_size + hidden_size, 4 * hidden_size)

    # One-time weight repack (NOT in the per-step hot path).
    w_p, b_p = prepare_lstm_params(w, b, input_size, hidden_size)

    c_prime, h_prime = lstm_cell(x, h, c, w_p, b_p)
    jax.block_until_ready((c_prime, h_prime))

    c_ref, h_ref = _reference_lstm_cell(x, h, c, w, b)
    assert c_prime.shape == (batch, hidden_size)
    assert h_prime.shape == (batch, hidden_size)
    # bf16 matmul operands + approx reciprocal -> compare with modest tolerance.
    # (Single step only; a fused recurrent loop should validate drift over T.)
    assert jnp.allclose(c_prime, c_ref, atol=3e-2, rtol=3e-2), (
        float(jnp.max(jnp.abs(c_prime - c_ref))))
    assert jnp.allclose(h_prime, h_ref, atol=3e-2, rtol=3e-2), (
        float(jnp.max(jnp.abs(h_prime - h_ref))))

    print("KERNEL_OK")
</pallas_src>

<mosaic_0001>
module attributes {stable_mosaic.version = 11 : i64} {
  func.func @_lstm_cell_kernel(%arg0: i32, %arg1: i32, %arg2: i32, %arg3: memref<8x128xbf16, #tpu.memory_space<vmem>>, %arg4: memref<128x512xbf16, #tpu.memory_space<vmem>>, %arg5: memref<1x512xf32, #tpu.memory_space<vmem>>, %arg6: memref<8x128xf32, #tpu.memory_space<vmem>>, %arg7: memref<8x128xf32, #tpu.memory_space<vmem>>, %arg8: memref<8x128xf32, #tpu.memory_space<vmem>>, %arg9: memref<8x512xf32, #tpu.memory_space<vmem>>) attributes {dimension_semantics = [#tpu.dimension_semantics<parallel>, #tpu.dimension_semantics<parallel>, #tpu.dimension_semantics<arbitrary>], iteration_bounds = array<i64: 1, 1, 1>, scalar_prefetch = 0 : i64, scratch_operands = 1 : i64, tpu.core_type = #tpu.core_type<tc>, window_params = [{transform_indices = @transform_0, window_bounds = array<i64: 8, 128>}, {transform_indices = @transform_1, window_bounds = array<i64: 128, 512>}, {transform_indices = @transform_2, window_bounds = array<i64: 1, 512>}, {transform_indices = @transform_3, window_bounds = array<i64: 8, 128>}, {transform_indices = @transform_4, window_bounds = array<i64: 8, 128>}, {transform_indices = @transform_5, window_bounds = array<i64: 8, 128>}]} {
    %c0_i32 = arith.constant 0 : i32
    %0 = arith.cmpi eq, %arg2, %c0_i32 : i32
    %1 = arith.extui %0 : i1 to i32
    %c0_i32_0 = arith.constant 0 : i32
    %2 = arith.cmpi ne, %1, %c0_i32_0 : i32
    scf.if %2 {
      %c0_10 = arith.constant 0 : index
      %c0_11 = arith.constant 0 : index
      %12 = vector.load %arg5[%c0_10, %c0_11] : memref<1x512xf32, #tpu.memory_space<vmem>>, vector<1x512xf32>
      %13 = vector.shape_cast %12 : vector<1x512xf32> to vector<1x512xf32>
      %14 = vector.broadcast %13 : vector<1x512xf32> to vector<8x512xf32>
      %c0_12 = arith.constant 0 : index
      %c0_13 = arith.constant 0 : index
      %15 = vector.load %arg9[%c0_12, %c0_13] : memref<8x512xf32, #tpu.memory_space<vmem>>, vector<8x512xf32>
      tpu.vector_store %arg9[%c0_12, %c0_13], %14 {strides = array<i32>} : memref<8x512xf32, #tpu.memory_space<vmem>>, vector<8x512xf32>,
    } else {
    }
    %c0 = arith.constant 0 : index
    %c0_1 = arith.constant 0 : index
    %3 = vector.load %arg9[%c0, %c0_1] : memref<8x512xf32, #tpu.memory_space<vmem>>, vector<8x512xf32>
    %c0_2 = arith.constant 0 : index
    %c0_3 = arith.constant 0 : index
    %4 = vector.load %arg3[%c0_2, %c0_3] : memref<8x128xbf16, #tpu.memory_space<vmem>>, vector<8x128xbf16>
    %c0_4 = arith.constant 0 : index
    %c0_5 = arith.constant 0 : index
    %5 = vector.load %arg4[%c0_4, %c0_5] : memref<128x512xbf16, #tpu.memory_space<vmem>>, vector<128x512xbf16>
    %cst = arith.constant dense<0.000000e+00> : vector<8x512xf32>
    %6 = tpu.matmul %4, %5, %cst {dimension_numbers = #tpu.dot_dimension_numbers<[1], [0], [0], [1], [0, 0, 1, 1], [], []>} : vector<8x128xbf16>, vector<128x512xbf16>, vector<8x512xf32> -> vector<8x512xf32>
    %7 = arith.addf %3, %6 : vector<8x512xf32>
    %c0_6 = arith.constant 0 : index
    %c0_7 = arith.constant 0 : index
    %8 = vector.load %arg9[%c0_6, %c0_7] : memref<8x512xf32, #tpu.memory_space<vmem>>, vector<8x512xf32>
    tpu.vector_store %arg9[%c0_6, %c0_7], %7 {strides = array<i32>} : memref<8x512xf32, #tpu.memory_space<vmem>>, vector<8x512xf32>,
    %c0_i32_8 = arith.constant 0 : i32
    %9 = arith.cmpi eq, %arg2, %c0_i32_8 : i32
    %10 = arith.extui %9 : i1 to i32
    %c0_i32_9 = arith.constant 0 : i32
    %11 = arith.cmpi ne, %10, %c0_i32_9 : i32
    scf.if %11 {
      %c0_10 = arith.constant 0 : index
      %c128 = arith.constant 128 : index
      %12 = vector.load %arg9[%c0_10, %c128] : memref<8x512xf32, #tpu.memory_space<vmem>>, vector<8x128xf32>
      %cst_11 = arith.constant 0.000000e+00 : f32
      %13 = vector.broadcast %cst_11 : f32 to vector<8x128xf32>
      %14 = arith.subf %13, %12 : vector<8x128xf32>
      %15 = math.exp %14 : vector<8x128xf32>
      %cst_12 = arith.constant 1.000000e+00 : f32
      %16 = vector.broadcast %cst_12 : f32 to vector<8x128xf32>
      %17 = arith.addf %16, %15 : vector<8x128xf32>
      %18 = tpu.reciprocal %17 {approx = true} : vector<8x128xf32> -> vector<8x128xf32>
      %c0_13 = arith.constant 0 : index
      %c0_14 = arith.constant 0 : index
      %19 = vector.load %arg6[%c0_13, %c0_14] : memref<8x128xf32, #tpu.memory_space<vmem>>, vector<8x128xf32>
      %20 = arith.mulf %18, %19 : vector<8x128xf32>
      %c0_15 = arith.constant 0 : index
      %c0_16 = arith.constant 0 : index
      %21 = vector.load %arg9[%c0_15, %c0_16] : memref<8x512xf32, #tpu.memory_space<vmem>>, vector<8x128xf32>
      %cst_17 = arith.constant 0.000000e+00 : f32
      %22 = vector.broadcast %cst_17 : f32 to vector<8x128xf32>
      %23 = arith.subf %22, %21 : vector<8x128xf32>
      %24 = math.exp %23 : vector<8x128xf32>
      %cst_18 = arith.constant 1.000000e+00 : f32
      %25 = vector.broadcast %cst_18 : f32 to vector<8x128xf32>
      %26 = arith.addf %25, %24 : vector<8x128xf32>
      %27 = tpu.reciprocal %26 {approx = true} : vector<8x128xf32> -> vector<8x128xf32>
      %c0_19 = arith.constant 0 : index
      %c256 = arith.constant 256 : index
      %28 = vector.load %arg9[%c0_19, %c256] : memref<8x512xf32, #tpu.memory_space<vmem>>, vector<8x128xf32>
      %29 = math.tanh %28 : vector<8x128xf32>
      %30 = arith.mulf %27, %29 : vector<8x128xf32>
      %31 = arith.addf %20, %30 : vector<8x128xf32>
      %c0_20 = arith.constant 0 : index
      %c0_21 = arith.constant 0 : index
      %32 = vector.load %arg7[%c0_20, %c0_21] : memref<8x128xf32, #tpu.memory_space<vmem>>, vector<8x128xf32>
      tpu.vector_store %arg7[%c0_20, %c0_21], %31 {strides = array<i32>} : memref<8x128xf32, #tpu.memory_space<vmem>>, vector<8x128xf32>,
      %c0_22 = arith.constant 0 : index
      %c384 = arith.constant 384 : index
      %33 = vector.load %arg9[%c0_22, %c384] : memref<8x512xf32, #tpu.memory_space<vmem>>, vector<8x128xf32>
      %cst_23 = arith.constant 0.000000e+00 : f32
      %34 = vector.broadcast %cst_23 : f32 to vector<8x128xf32>
      %35 = arith.subf %34, %33 : vector<8x128xf32>
      %36 = math.exp %35 : vector<8x128xf32>
      %cst_24 = arith.constant 1.000000e+00 : f32
      %37 = vector.broadcast %cst_24 : f32 to vector<8x128xf32>
      %38 = arith.addf %37, %36 : vector<8x128xf32>
      %39 = tpu.reciprocal %38 {approx = true} : vector<8x128xf32> -> vector<8x128xf32>
      %40 = math.tanh %31 : vector<8x128xf32>
      %41 = arith.mulf %39, %40 : vector<8x128xf32>
      %c0_25 = arith.constant 0 : index
      %c0_26 = arith.constant 0 : index
      %42 = vector.load %arg8[%c0_25, %c0_26] : memref<8x128xf32, #tpu.memory_space<vmem>>, vector<8x128xf32>
      tpu.vector_store %arg8[%c0_25, %c0_26], %41 {strides = array<i32>} : memref<8x128xf32, #tpu.memory_space<vmem>>, vector<8x128xf32>,
    } else {
    }
    return
  }
  func.func @transform_0(%arg0: i32, %arg1: i32, %arg2: i32) -> (i32, i32) {
    %c0_i32 = arith.constant 0 : i32
    return %arg0, %arg2 : i32, i32
  }
  func.func @transform_1(%arg0: i32, %arg1: i32, %arg2: i32) -> (i32, i32) {
    %c0_i32 = arith.constant 0 : i32
    return %arg2, %arg1 : i32, i32
  }
  func.func @transform_2(%arg0: i32, %arg1: i32, %arg2: i32) -> (i32, i32) {
    %c0_i32 = arith.constant 0 : i32
    %c0_i32_0 = arith.constant 0 : i32
    return %c0_i32, %arg1 : i32, i32
  }
  func.func @transform_3(%arg0: i32, %arg1: i32, %arg2: i32) -> (i32, i32) {
    %c0_i32 = arith.constant 0 : i32
    return %arg0, %arg1 : i32, i32
  }
  func.func @transform_4(%arg0: i32, %arg1: i32, %arg2: i32) -> (i32, i32) {
    %c0_i32 = arith.constant 0 : i32
    return %arg0, %arg1 : i32, i32
  }
  func.func @transform_5(%arg0: i32, %arg1: i32, %arg2: i32) -> (i32, i32) {
    %c0_i32 = arith.constant 0 : i32
    return %arg0, %arg1 : i32, i32
  }
}

</mosaic_0001>

<llo_original>
// kernel: lstm_cell.1
$region0: #{lstm_cell.1}
  #allocation0 [shape = 'u32[]', space=smem, size = 0x4, offset = 0x4, fixed_abs, tag = 'smem constant byte address 0x4 - core index']
  #allocation1 [shape = 'u32[144,128]{1,0:T(1,128)}', space=vmem, size = 0x12000, scoped, tag = 'internal scratch']
  #allocation2 [shape = 'f32[8,512]{1,0:T(8,128)}', space=vmem, size = 0x4000, scoped, tag = 'scratch operand']
  %s0 = inlined_call_operand.vmem [shape: bf16[8,128], index: 0, kind: input, shape index: {}]
  %s1 = inlined_call_operand.hbm [shape: bf16[128,512], index: 1, kind: input, shape index: {}]
  %s2 = inlined_call_operand.vmem [shape: f32[1,512], index: 2, kind: input, shape index: {}]
  %s3 = inlined_call_operand.vmem [shape: f32[8,128], index: 3, kind: input, shape index: {}]
  %s4 = inlined_call_operand.hbm [shape: f32[8,128], index: 4, kind: output, shape index: {0}]
  %s5 = inlined_call_operand.hbm [shape: f32[8,128], index: 5, kind: output, shape index: {1}]
  %6 = xla_tuple %s4, %s5
  %s7 = sld [smem:[#allocation0]]
  $region46: #{lstm_cell.1} parent=0
    _
  %s9 = ssub.s32 1, %s7
  %s10 = scalar_select 0, %s9, %s7
  $region1: #{lstm_cell.1} parent=0
    #allocation3 [shape = 'u8[131072]{0}', space=vmem, size = 0x20000, scoped, tag = 'input window, operand 1, single buffered']
    #allocation4 [shape = 's32[1]{0}', space=sflag, size = 0x4, scoped, tag = 'scoped memory for lstm_cell.1']
    #allocation5 [shape = 's32[1]{0}', space=sflag, size = 0x4, scoped, tag = 'scoped memory for lstm_cell.1']
    #allocation6 [shape = 'u8[4096]{0}', space=vmem, size = 0x1000, scoped, tag = 'output window, operand 0, single buffered']
    #allocation7 [shape = 'u8[4096]{0}', space=vmem, size = 0x1000, scoped, tag = 'output window, operand 1, single buffered']
    #allocation8 [shape = 's32[1]{0}', space=sflag, size = 0x4, scoped, tag = 'scoped memory for lstm_cell.1']
    %11 = vsyncpa [#allocation4], 0
    %12 = vsyncpa [#allocation5], 0
    %13 = vsyncpa [#allocation8], 0
    // Predicated region
    $region2: #{lstm_cell.1} parent=1 // pred_check
      _
    $region3: #{lstm_cell.1} parent=1 // pred_check_branch
      %15 = sbr.rel (0) target = $region5
    $region4: #{lstm_cell.1} parent=1 // pred_region
      _
    $region5: #{lstm_cell.1} parent=1 // pred_fallthru
      _
    // Predicated region
    $region6: #{lstm_cell.1} parent=1 // pred_check
      _
    $region7: #{lstm_cell.1} parent=1 // pred_check_branch
      %17 = sbr.rel (0) target = $region9
    $region8: #{lstm_cell.1} parent=1 // pred_region
      %s19 = ssub.s32 4096, 4096
      %20 = vsyncadd [#allocation4], %s19
      %s21 = sshll.u32 [#allocation3], 4
      %s22 = int_to_ptr.vmem [resolvable:$true] %s21
      %27 = dma.hbm_to_vmem [thread:$0]  %s1, 4096, %s22, [#allocation4], 256, 256, 16
    $region9: #{lstm_cell.1} parent=1 // pred_fallthru
      _
    // Predicated region
    $region10: #{lstm_cell.1} parent=1 // pred_check
      _
    $region11: #{lstm_cell.1} parent=1 // pred_check_branch
      %29 = sbr.rel (0) target = $region13
    $region12: #{lstm_cell.1} parent=1 // pred_region
      _
    $region13: #{lstm_cell.1} parent=1 // pred_fallthru
      _
    // Predicated region
    $region14: #{lstm_cell.1} parent=1 // pred_check
      _
    $region15: #{lstm_cell.1} parent=1 // pred_check_branch
      %31 = sbr.rel (0) target = $region17
    $region16: #{lstm_cell.1} parent=1 // pred_region
      _
    $region17: #{lstm_cell.1} parent=1 // pred_fallthru
      _
    // Predicated region
    $region18: #{lstm_cell.1} parent=1 // pred_check
      _
    $region19: #{lstm_cell.1} parent=1 // pred_check_branch
      %33 = sbr.rel (0) target = $region21
    $region20: #{lstm_cell.1} parent=1 // pred_region
      %34 = dma.done [#allocation4], 4096
    $region21: #{lstm_cell.1} parent=1 // pred_fallthru
      _
    %p36 = scmp.eq.s32.totalorder 0, 0
    // Predicated region
    $region22: #{lstm_cell.1} parent=1 // pred_check
      %p37 = pneg %p36
    $region23: #{lstm_cell.1} parent=1 // pred_check_branch
      %39 = sbr.rel (%p37) target = $region25
    $region24: #{lstm_cell.1} parent=1 // pred_region
      %v40 = vld [vmem:[%s2] sm:$0xf]
      %v42 = vlaneseq
      %v43 = vshrl.u32 %v42, 7
      %v44 = vsub.s32 0, %v43
      %v45 = vrot.slane %v40, %v44
      %v46 = vlaneseq
      %v47 = vshrl.u32 %v46, 7
      %v48 = vsub.s32 1, %v47
      %v49 = vrot.slane %v40, %v48
      %v50 = vlaneseq
      %v51 = vshrl.u32 %v50, 7
      %v52 = vsub.s32 2, %v51
      %v53 = vrot.slane %v40, %v52
      %v54 = vlaneseq
      %v55 = vshrl.u32 %v54, 7
      %v56 = vsub.s32 3, %v55
      %v57 = vrot.slane %v40, %v56
      %62 = vst [vmem:[#allocation2] sm:$0xff] %v45
      %63 = vst [vmem:[#allocation2 + $0x8] sm:$0xff] %v49
      %64 = vst [vmem:[#allocation2 + $0x10] sm:$0xff] %v53
      %65 = vst [vmem:[#allocation2 + $0x18] sm:$0xff] %v57
    $region25: #{lstm_cell.1} parent=1 // pred_fallthru
      _
    %v66 = vld [vmem:[#allocation2] sm:$0xff]
    %v67 = vld [vmem:[#allocation2 + $0x8] sm:$0xff]
    %v68 = vld [vmem:[#allocation2 + $0x10] sm:$0xff]
    %v69 = vld [vmem:[#allocation2 + $0x18] sm:$0xff]
    %v70 = vld [vmem:[%s0] sm:$0xf]
    %v71 = vld [vmem:[#allocation3] sm:$0xff]
    %v72 = vld [vmem:[#allocation3 + $0x8] sm:$0xff]
    %v73 = vld [vmem:[#allocation3 + $0x10] sm:$0xff]
    %v74 = vld [vmem:[#allocation3 + $0x18] sm:$0xff]
    %v75 = vld [vmem:[#allocation3 + $0x20] sm:$0xff]
    %v76 = vld [vmem:[#allocation3 + $0x28] sm:$0xff]
    %v77 = vld [vmem:[#allocation3 + $0x30] sm:$0xff]
    %v78 = vld [vmem:[#allocation3 + $0x38] sm:$0xff]
    %v79 = vld [vmem:[#allocation3 + $0x40] sm:$0xff]
    %v80 = vld [vmem:[#allocation3 + $0x48] sm:$0xff]
    %v81 = vld [vmem:[#allocation3 + $0x50] sm:$0xff]
    %v82 = vld [vmem:[#allocation3 + $0x58] sm:$0xff]
    %v83 = vld [vmem:[#allocation3 + $0x60] sm:$0xff]
    %v84 = vld [vmem:[#allocation3 + $0x68] sm:$0xff]
    %v85 = vld [vmem:[#allocation3 + $0x70] sm:$0xff]
    %v86 = vld [vmem:[#allocation3 + $0x78] sm:$0xff]
    %v87 = vld [vmem:[#allocation3 + $0x80] sm:$0xff]
    %v88 = vld [vmem:[#allocation3 + $0x88] sm:$0xff]
    %v89 = vld [vmem:[#allocation3 + $0x90] sm:$0xff]
    %v90 = vld [vmem:[#allocation3 + $0x98] sm:$0xff]
    %v91 = vld [vmem:[#allocation3 + $0xa0] sm:$0xff]
    %v92 = vld [vmem:[#allocation3 + $0xa8] sm:$0xff]
    %v93 = vld [vmem:[#allocation3 + $0xb0] sm:$0xff]
    %v94 = vld [vmem:[#allocation3 + $0xb8] sm:$0xff]
    %v95 = vld [vmem:[#allocation3 + $0xc0] sm:$0xff]
    %v96 = vld [vmem:[#allocation3 + $0xc8] sm:$0xff]
    %v97 = vld [vmem:[#allocation3 + $0xd0] sm:$0xff]
    %v98 = vld [vmem:[#allocation3 + $0xd8] sm:$0xff]
    %v99 = vld [vmem:[#allocation3 + $0xe0] sm:$0xff]
    %v100 = vld [vmem:[#allocation3 + $0xe8] sm:$0xff]
    %v101 = vld [vmem:[#allocation3 + $0xf0] sm:$0xff]
    %v102 = vld [vmem:[#allocation3 + $0xf8] sm:$0xff]
    %v135 = vunpack.c.l.b16 %v71
    %v136 = vunpack.c.h.b16 %v71
    %v137 = vunpack.c.l.b16 %v72
    %v138 = vunpack.c.h.b16 %v72
    %v139 = vunpack.c.l.b16 %v73
    %v140 = vunpack.c.h.b16 %v73
    %v141 = vunpack.c.l.b16 %v74
    %v142 = vunpack.c.h.b16 %v74
    %v143 = vunpack.c.l.b16 %v75
    %v144 = vunpack.c.h.b16 %v75
    %v145 = vunpack.c.l.b16 %v76
    %v146 = vunpack.c.h.b16 %v76
    %v147 = vunpack.c.l.b16 %v77
    %v148 = vunpack.c.h.b16 %v77
    %v149 = vunpack.c.l.b16 %v78
    %v150 = vunpack.c.h.b16 %v78
    %v151 = vunpack.c.l.b16 %v79
    %v152 = vunpack.c.h.b16 %v79
    %v153 = vunpack.c.l.b16 %v80
    %v154 = vunpack.c.h.b16 %v80
    %v155 = vunpack.c.l.b16 %v81
    %v156 = vunpack.c.h.b16 %v81
    %v157 = vunpack.c.l.b16 %v82
    %v158 = vunpack.c.h.b16 %v82
    %v159 = vunpack.c.l.b16 %v83
    %v160 = vunpack.c.h.b16 %v83
    %v161 = vunpack.c.l.b16 %v84
    %v162 = vunpack.c.h.b16 %v84
    %v163 = vunpack.c.l.b16 %v85
    %v164 = vunpack.c.h.b16 %v85
    %v165 = vunpack.c.l.b16 %v86
    %v166 = vunpack.c.h.b16 %v86
    %v167 = vunpack.c.l.b16 %v87
    %v168 = vunpack.c.h.b16 %v87
    %v169 = vunpack.c.l.b16 %v88
    %v170 = vunpack.c.h.b16 %v88
    %v171 = vunpack.c.l.b16 %v89
    %v172 = vunpack.c.h.b16 %v89
    %v173 = vunpack.c.l.b16 %v90
    %v174 = vunpack.c.h.b16 %v90
    %v175 = vunpack.c.l.b16 %v91
    %v176 = vunpack.c.h.b16 %v91
    %v177 = vunpack.c.l.b16 %v92
    %v178 = vunpack.c.h.b16 %v92
    %v179 = vunpack.c.l.b16 %v93
    %v180 = vunpack.c.h.b16 %v93
    %v181 = vunpack.c.l.b16 %v94
    %v182 = vunpack.c.h.b16 %v94
    %v183 = vunpack.c.l.b16 %v95
    %v184 = vunpack.c.h.b16 %v95
    %v185 = vunpack.c.l.b16 %v96
    %v186 = vunpack.c.h.b16 %v96
    %v187 = vunpack.c.l.b16 %v97
    %v188 = vunpack.c.h.b16 %v97
    %v189 = vunpack.c.l.b16 %v98
    %v190 = vunpack.c.h.b16 %v98
    %v191 = vunpack.c.l.b16 %v99
    %v192 = vunpack.c.h.b16 %v99
    %v193 = vunpack.c.l.b16 %v100
    %v194 = vunpack.c.h.b16 %v100
    %v195 = vunpack.c.l.b16 %v101
    %v196 = vunpack.c.h.b16 %v101
    %v197 = vunpack.c.l.b16 %v102
    %v198 = vunpack.c.h.b16 %v102
    %v199 = vpack.c.b16 %v139, %v135
    %v200 = vpack.c.b16 %v140, %v136
    %v201 = vpack.c.b16 %v141, %v137
    %v202 = vpack.c.b16 %v142, %v138
    %v203 = vpack.c.b16 %v147, %v143
    %v204 = vpack.c.b16 %v148, %v144
    %v205 = vpack.c.b16 %v149, %v145
    %v206 = vpack.c.b16 %v150, %v146
    %v207 = vpack.c.b16 %v155, %v151
    %v208 = vpack.c.b16 %v156, %v152
    %v209 = vpack.c.b16 %v157, %v153
    %v210 = vpack.c.b16 %v158, %v154
    %v211 = vpack.c.b16 %v163, %v159
    %v212 = vpack.c.b16 %v164, %v160
    %v213 = vpack.c.b16 %v165, %v161
    %v214 = vpack.c.b16 %v166, %v162
    %v215 = vpack.c.b16 %v171, %v167
    %v216 = vpack.c.b16 %v172, %v168
    %v217 = vpack.c.b16 %v173, %v169
    %v218 = vpack.c.b16 %v174, %v170
    %v219 = vpack.c.b16 %v179, %v175
    %v220 = vpack.c.b16 %v180, %v176
    %v221 = vpack.c.b16 %v181, %v177
    %v222 = vpack.c.b16 %v182, %v178
    %v223 = vpack.c.b16 %v187, %v183
    %v224 = vpack.c.b16 %v188, %v184
    %v225 = vpack.c.b16 %v189, %v185
    %v226 = vpack.c.b16 %v190, %v186
    %v227 = vpack.c.b16 %v195, %v191
    %v228 = vpack.c.b16 %v196, %v192
    %v229 = vpack.c.b16 %v197, %v193
    %v230 = vpack.c.b16 %v198, %v194
    %263 = vmatprep.subr.bf16.mxu0 %v200
    %264 = vmatpush1.bf16.msra.mxu0 %v199
    %265 = vmatprep.subr.bf16.mxu0 %v204
    %266 = vmatpush1.bf16.msra.mxu0 %v203
    %267 = vmatprep.subr.bf16.mxu0 %v208
    %268 = vmatpush1.bf16.msra.mxu0 %v207
    %269 = vmatprep.subr.bf16.mxu0 %v212
    %270 = vmatpush1.bf16.msra.mxu0 %v211
    %271 = vmatprep.subr.bf16.mxu0 %v216
    %272 = vmatpush1.bf16.msra.mxu0 %v215
    %273 = vmatprep.subr.bf16.mxu0 %v220
    %274 = vmatpush1.bf16.msra.mxu0 %v219
    %275 = vmatprep.subr.bf16.mxu0 %v224
    %276 = vmatpush1.bf16.msra.mxu0 %v223
    %277 = vmatprep.subr.bf16.mxu0 %v228
    %278 = vmatpush1.bf16.msra.mxu0 %v227
    %279 = vmatprep.subr.bf16.mxu0 0
    %280 = vmatpush1.bf16.msra.mxu0 0
    %281 = vmatprep.subr.bf16.mxu0 0
    %282 = vmatpush1.bf16.msra.mxu0 0
    %283 = vmatprep.subr.bf16.mxu0 0
    %284 = vmatpush1.bf16.msra.mxu0 0
    %285 = vmatprep.subr.bf16.mxu0 0
    %286 = vmatpush1.bf16.msra.mxu0 0
    %287 = vmatprep.subr.bf16.mxu0 0
    %288 = vmatpush1.bf16.msra.mxu0 0
    %289 = vmatprep.subr.bf16.mxu0 0
    %290 = vmatpush1.bf16.msra.mxu0 0
    %291 = vmatprep.subr.bf16.mxu0 0
    %292 = vmatpush1.bf16.msra.mxu0 0
    %293 = vmatprep.subr.bf16.mxu0 0
    %294 = vmatpush1.bf16.msra.mxu0 0
    %295 = vmatprep.mubr.bf16.mxu0 0
    %296 = vmatmul.mubr.bf16.gmra.mrb[0].mxu0 %v70
    %v297 = vpop.f32.mrb[0].mxu0
    %v298 = vadd.f32 0.0, %v297
    %v299 = vpop.f32.mrb[0].mxu0
    %v300 = vadd.f32 0.0, %v299
    %v301 = vpop.f32.mrb[0].mxu0
    %v302 = vpop.f32.mrb[0].mxu0
    %303 = vdwg.mxu0
    %304 = vmatprep.subr.bf16.mxu0 %v202
    %305 = vmatpush1.bf16.msra.mxu0 %v201
    %306 = vmatprep.subr.bf16.mxu0 %v206
    %307 = vmatpush1.bf16.msra.mxu0 %v205
    %308 = vmatprep.subr.bf16.mxu0 %v210
    %309 = vmatpush1.bf16.msra.mxu0 %v209
    %310 = vmatprep.subr.bf16.mxu0 %v214
    %311 = vmatpush1.bf16.msra.mxu0 %v213
    %312 = vmatprep.subr.bf16.mxu0 %v218
    %313 = vmatpush1.bf16.msra.mxu0 %v217
    %314 = vmatprep.subr.bf16.mxu0 %v222
    %315 = vmatpush1.bf16.msra.mxu0 %v221
    %316 = vmatprep.subr.bf16.mxu0 %v226
    %317 = vmatpush1.bf16.msra.mxu0 %v225
    %318 = vmatprep.subr.bf16.mxu0 %v230
    %319 = vmatpush1.bf16.msra.mxu0 %v229
    %320 = vmatprep.subr.bf16.mxu0 0
    %321 = vmatpush1.bf16.msra.mxu0 0
    %322 = vmatprep.subr.bf16.mxu0 0
    %323 = vmatpush1.bf16.msra.mxu0 0
    %324 = vmatprep.subr.bf16.mxu0 0
    %325 = vmatpush1.bf16.msra.mxu0 0
    %326 = vmatprep.subr.bf16.mxu0 0
    %327 = vmatpush1.bf16.msra.mxu0 0
    %328 = vmatprep.subr.bf16.mxu0 0
    %329 = vmatpush1.bf16.msra.mxu0 0
    %330 = vmatprep.subr.bf16.mxu0 0
    %331 = vmatpush1.bf16.msra.mxu0 0
    %332 = vmatprep.subr.bf16.mxu0 0
    %333 = vmatpush1.bf16.msra.mxu0 0
    %334 = vmatprep.subr.bf16.mxu0 0
    %335 = vmatpush1.bf16.msra.mxu0 0
    %336 = vmatprep.mubr.bf16.mxu0 0
    %337 = vmatmul.mubr.bf16.gmra.mrb[0].mxu0 %v70
    %v338 = vpop.f32.mrb[0].mxu0
    %v339 = vadd.f32 0.0, %v338
    %v340 = vpop.f32.mrb[0].mxu0
    %v341 = vadd.f32 0.0, %v340
    %v342 = vpop.f32.mrb[0].mxu0
    %v343 = vpop.f32.mrb[0].mxu0
    %344 = vdwg.mxu0
    %v345 = vadd.f32 %v66, %v298
    %v346 = vadd.f32 %v67, %v300
    %v347 = vadd.f32 %v68, %v339
    %v348 = vadd.f32 %v69, %v341
    %349 = vst [vmem:[#allocation2] sm:$0xff] %v345
    %350 = vst [vmem:[#allocation2 + $0x8] sm:$0xff] %v346
    %351 = vst [vmem:[#allocation2 + $0x10] sm:$0xff] %v347
    %352 = vst [vmem:[#allocation2 + $0x18] sm:$0xff] %v348
    // Predicated region
    $region26: #{lstm_cell.1} parent=1 // pred_check
      %p353 = pneg %p36
    $region27: #{lstm_cell.1} parent=1 // pred_check_branch
      %355 = sbr.rel (%p353) target = $region29
    $region28: #{lstm_cell.1} parent=1 // pred_region
      %v356 = vld [vmem:[#allocation2 + $0x8] sm:$0xff]
      %v357 = vsub.f32 0.0, %v356
      %v358 = vmul.f32 %v357, 1.442695
      %v359 = vpow.pop %v358
      %v360 = vadd.f32 %v359, 1.0
      %v361 = vrcp.pop %v360
      %v362 = vld [vmem:[%s3] sm:$0xff]
      %v363 = vmul.f32 %v361, %v362
      %v364 = vld [vmem:[#allocation2] sm:$0xff]
      %v365 = vsub.f32 0.0, %v364
      %v366 = vmul.f32 %v365, 1.442695
      %v367 = vpow.pop %v366
      %v368 = vadd.f32 %v367, 1.0
      %v369 = vrcp.pop %v368
      %v370 = vld [vmem:[#allocation2 + $0x10] sm:$0xff]
      %v371 = vtanh.pop %v370
      %v372 = vmul.f32 %v369, %v371
      %v373 = vadd.f32 %v363, %v372
      %374 = vst [vmem:[#allocation6] sm:$0xff] %v373
      %v375 = vld [vmem:[#allocation2 + $0x18] sm:$0xff]
      %v376 = vsub.f32 0.0, %v375
      %v377 = vmul.f32 %v376, 1.442695
      %v378 = vpow.pop %v377
      %v379 = vadd.f32 %v378, 1.0
      %v380 = vrcp.pop %v379
      %v381 = vtanh.pop %v373
      %v382 = vmul.f32 %v380, %v381
      %383 = vst [vmem:[#allocation7] sm:$0xff] %v382
    $region29: #{lstm_cell.1} parent=1 // pred_fallthru
      _
    // Predicated region
    $region30: #{lstm_cell.1} parent=1 // pred_check
      _
    $region31: #{lstm_cell.1} parent=1 // pred_check_branch
      %385 = sbr.rel (0) target = $region33
    $region32: #{lstm_cell.1} parent=1 // pred_region
      %s387 = ssub.s32 128, 128
      %388 = vsyncadd [#allocation5], %s387
      %s390 = sshll.u32 [#allocation6], 4
      %s391 = int_to_ptr.vmem [resolvable:$true] %s390
      %393 = dma.vmem_to_hbm [thread:$0]  %s391, 128, %s4, [#allocation5]
    $region33: #{lstm_cell.1} parent=1 // pred_fallthru
      _
    // Predicated region
    $region34: #{lstm_cell.1} parent=1 // pred_check
      _
    $region35: #{lstm_cell.1} parent=1 // pred_check_branch
      %395 = sbr.rel (0) target = $region37
    $region36: #{lstm_cell.1} parent=1 // pred_region
      %s397 = ssub.s32 128, 128
      %398 = vsyncadd [#allocation8], %s397
      %s400 = sshll.u32 [#allocation7], 4
      %s401 = int_to_ptr.vmem [resolvable:$true] %s400
      %403 = dma.vmem_to_hbm [thread:$0]  %s401, 128, %s5, [#allocation8]
    $region37: #{lstm_cell.1} parent=1 // pred_fallthru
      _
    // Predicated region
    $region38: #{lstm_cell.1} parent=1 // pred_check
      _
    $region39: #{lstm_cell.1} parent=1 // pred_check_branch
      %405 = sbr.rel (0) target = $region41
    $region40: #{lstm_cell.1} parent=1 // pred_region
      %406 = dma.done [#allocation5], 128
    $region41: #{lstm_cell.1} parent=1 // pred_fallthru
      _
    // Predicated region
    $region42: #{lstm_cell.1} parent=1 // pred_check
      _
    $region43: #{lstm_cell.1} parent=1 // pred_check_branch
      %408 = sbr.rel (0) target = $region45
    $region44: #{lstm_cell.1} parent=1 // pred_region
      %409 = dma.done [#allocation8], 128
    $region45: #{lstm_cell.1} parent=1 // pred_fallthru
      _
    %410 = vsyncpa [#allocation4], 1
    %411 = vsyncpa [#allocation5], 1
    %412 = vsyncpa [#allocation8], 1

</llo_original>
